<compile_context>
chip_gen: v5e
topology: v5e:2x2
jax: 0.10.0
libtpu: 0.0.40
codegen_flags: <defaults>
</compile_context>

<pallas_src>
import jax
import jax.numpy as jnp
from jax.experimental import pallas as pl
from jax.experimental.pallas import tpu as pltpu

EPS = 1e-5
LANE = 128


def _round_up(v, m):
    return (v + m - 1) // m * m


def _pad2(a, shape):
    pads = [(0, t - s) for s, t in zip(a.shape, shape)]
    if all(p == (0, 0) for p in pads):
        return a
    return jnp.pad(a, pads)


def _batch_stats(v, inv_n):
    """Single-pass per-feature batch stats on the MXU: sum = 1xN @ v, sumsq = 1xN @ v*v."""
    ones_row = jnp.ones((1, v.shape[0]), dtype=jnp.float32)
    s = jnp.dot(ones_row, v, preferred_element_type=jnp.float32)
    sq = jnp.dot(ones_row, v * v, preferred_element_type=jnp.float32)
    mean = s * inv_n
    var = jnp.maximum(sq * inv_n - mean * mean, 0.0)
    return mean, var


def _proj_head_kernel(x_ref, w1_ref, g1_ref, b1_ref, w2_ref, g2_ref, b2_ref,
                      o_ref, acc_ref):
    k = pl.program_id(0)
    n = x_ref.shape[0]
    inv_n = jnp.float32(1.0 / n)

    @pl.when(k == 0)
    def _init():
        acc_ref[...] = jnp.zeros_like(acc_ref)

    # ---- linear1 on this mid slab: bf16 MXU inputs, f32 accumulation ----
    h = jnp.dot(x_ref[...], w1_ref[...], preferred_element_type=jnp.float32)  # (N, tk) f32

    # ---- BN1 (training-mode biased batch stats, f32) + affine + ReLU ----
    mean1, var1 = _batch_stats(h, inv_n)
    h = (h - mean1) * jax.lax.rsqrt(var1 + EPS)
    h = jnp.maximum(h * g1_ref[...] + b1_ref[...], 0.0)

    # ---- linear2 partial product for this slab, accumulated in f32 VMEM scratch ----
    acc_ref[...] += jnp.dot(h.astype(jnp.bfloat16), w2_ref[...],
                            preferred_element_type=jnp.float32)

    # ---- BN2 + affine, only after the full mid reduction ----
    @pl.when(k == pl.num_programs(0) - 1)
    def _finalize():
        acc = acc_ref[...]
        mean2, var2 = _batch_stats(acc, inv_n)
        o = (acc - mean2) * jax.lax.rsqrt(var2 + EPS)
        o_ref[...] = (o * g2_ref[...] + b2_ref[...]).astype(o_ref.dtype)


def projection_head(x, w1, g1, b1, w2, g2, b2, *, mid_tile=LANE):
    """x: (N, hidden); w1: (hidden, mid) = linear1.weight.T; w2: (mid, out) = linear2.weight.T;
    g*/b*: per-feature BatchNorm gamma/beta."""
    n, hidden = x.shape
    mid = w1.shape[1]
    out_dim = w2.shape[1]
    assert w1.shape[0] == hidden and w2.shape[0] == mid

    hid_p = _round_up(hidden, LANE)
    mid_p = _round_up(mid, mid_tile)
    out_p = _round_up(out_dim, LANE)

    # bf16 MXU operands, zero-padded to 128-lane feature dims (BN-safe, see header).
    xb = _pad2(x.astype(jnp.bfloat16), (n, hid_p))
    w1b = _pad2(w1.astype(jnp.bfloat16), (hid_p, mid_p))
    w2b = _pad2(w2.astype(jnp.bfloat16), (mid_p, out_p))
    g1p = _pad2(g1.reshape(1, -1).astype(jnp.float32), (1, mid_p))
    b1p = _pad2(b1.reshape(1, -1).astype(jnp.float32), (1, mid_p))
    g2p = _pad2(g2.reshape(1, -1).astype(jnp.float32), (1, out_p))
    b2p = _pad2(b2.reshape(1, -1).astype(jnp.float32), (1, out_p))

    grid = (mid_p // mid_tile,)

    # VMEM budget: double-buffered blocks + f32 accumulator, 2x headroom, capped at
    # v7x's 64 MiB physical VMEM (also well above the 16/32 MiB default scoped limits).
    est = 2 * (n * hid_p * 2                 # x (resident bf16)
               + hid_p * mid_tile * 2        # w1 slab (bf16)
               + mid_tile * out_p * 2        # w2 slab (bf16)
               + 2 * mid_tile * 4            # gamma1/beta1 slabs
               + 2 * out_p * 4               # gamma2/beta2
               + n * out_p * 4)              # output block
    est += n * out_p * 4                     # accumulator scratch
    vmem_limit = int(min(max(2 * est, 16 << 20), 64 << 20))

    out = pl.pallas_call(
        _proj_head_kernel,
        out_shape=jax.ShapeDtypeStruct((n, out_p), jnp.float32),
        grid=grid,
        in_specs=[
            pl.BlockSpec((n, hid_p), lambda k: (0, 0)),         # x: resident
            pl.BlockSpec((hid_p, mid_tile), lambda k: (0, k)),  # w1 column slab
            pl.BlockSpec((1, mid_tile), lambda k: (0, k)),      # gamma1 slab
            pl.BlockSpec((1, mid_tile), lambda k: (0, k)),      # beta1 slab
            pl.BlockSpec((mid_tile, out_p), lambda k: (k, 0)),  # w2 row slab
            pl.BlockSpec((1, out_p), lambda k: (0, 0)),         # gamma2
            pl.BlockSpec((1, out_p), lambda k: (0, 0)),         # beta2
        ],
        out_specs=pl.BlockSpec((n, out_p), lambda k: (0, 0)),
        scratch_shapes=[pltpu.VMEM((n, out_p), jnp.float32)],
        compiler_params=pltpu.CompilerParams(
            dimension_semantics=("arbitrary",),   # linear2 reduction axis
            vmem_limit_bytes=vmem_limit,
        ),
    )(xb, w1b, g1p, b1p, w2b, g2p, b2p)
    return out[:, :out_dim]


def _reference(x_bf16, w1_bf16, g1, b1, w2_bf16, g2, b2):
    """f32 reference modelling the same quantization points as the kernel."""
    x = x_bf16.astype(jnp.float32)
    w1 = w1_bf16.astype(jnp.float32)
    w2 = w2_bf16.astype(jnp.float32)
    h = x @ w1
    m = h.mean(0, keepdims=True)
    v = ((h - m) ** 2).mean(0, keepdims=True)
    h = (h - m) / jnp.sqrt(v + EPS) * g1.reshape(1, -1) + b1.reshape(1, -1)
    h = jnp.maximum(h, 0.0)
    h = h.astype(jnp.bfloat16).astype(jnp.float32)  # kernel feeds linear2 LHS as bf16
    o = h @ w2
    m = o.mean(0, keepdims=True)
    v = ((o - m) ** 2).mean(0, keepdims=True)
    return (o - m) / jnp.sqrt(v + EPS) * g2.reshape(1, -1) + b2.reshape(1, -1)


if __name__ == "__main__":
    # Small, non-128-aligned shapes to exercise padding + a 2-step mid reduction grid.
    batch, hidden_dim, mid_dim, out_dim = 16, 96, 192, 48

    key = jax.random.PRNGKey(0)
    kx, kw1, kw2, kg1, kb1, kg2, kb2 = jax.random.split(key, 7)

    x = jax.random.normal(kx, (batch, hidden_dim), dtype=jnp.float32)
    # nn.Linear(in, out, bias=False).weight is (out, in); we store W^T = (in, out).
    w1 = jax.random.normal(kw1, (hidden_dim, mid_dim), jnp.float32) / jnp.sqrt(hidden_dim)
    w2 = jax.random.normal(kw2, (mid_dim, out_dim), jnp.float32) / jnp.sqrt(mid_dim)
    g1 = 1.0 + 0.1 * jax.random.normal(kg1, (mid_dim,), jnp.float32)
    b1 = 0.1 * jax.random.normal(kb1, (mid_dim,), jnp.float32)
    g2 = 1.0 + 0.1 * jax.random.normal(kg2, (out_dim,), jnp.float32)
    b2 = 0.1 * jax.random.normal(kb2, (out_dim,), jnp.float32)

    # Host-side bf16 for the MXU operands (halves HBM traffic / VMEM footprint).
    xb = x.astype(jnp.bfloat16)
    w1b = w1.astype(jnp.bfloat16)
    w2b = w2.astype(jnp.bfloat16)

    out = jax.block_until_ready(projection_head(xb, w1b, g1, b1, w2b, g2, b2))
    ref = _reference(xb, w1b, g1, b1, w2b, g2, b2)

    assert out.shape == (batch, out_dim)
    err = jnp.max(jnp.abs(out - ref))
    assert jnp.allclose(out, ref, atol=2e-3, rtol=2e-3), f"mismatch vs reference: {err}"

    print("KERNEL_OK")
</pallas_src>

<mosaic_0001>
module attributes {stable_mosaic.version = 11 : i64} {
  func.func @_proj_head_kernel(%arg0: i32, %arg1: memref<16x128xbf16, #tpu.memory_space<vmem>>, %arg2: memref<128x128xbf16, #tpu.memory_space<vmem>>, %arg3: memref<1x128xf32, #tpu.memory_space<vmem>>, %arg4: memref<1x128xf32, #tpu.memory_space<vmem>>, %arg5: memref<128x128xbf16, #tpu.memory_space<vmem>>, %arg6: memref<1x128xf32, #tpu.memory_space<vmem>>, %arg7: memref<1x128xf32, #tpu.memory_space<vmem>>, %arg8: memref<16x128xf32, #tpu.memory_space<vmem>>, %arg9: memref<16x128xf32, #tpu.memory_space<vmem>>) attributes {dimension_semantics = [#tpu.dimension_semantics<arbitrary>], iteration_bounds = array<i64: 2>, scalar_prefetch = 0 : i64, scratch_operands = 1 : i64, tpu.core_type = #tpu.core_type<tc>, window_params = [{pipeline_mode = #tpu.pipeline_mode<synchronous>, transform_indices = @transform_0, window_bounds = array<i64: 16, 128>}, {transform_indices = @transform_1, window_bounds = array<i64: 128, 128>}, {transform_indices = @transform_2, window_bounds = array<i64: 1, 128>}, {transform_indices = @transform_3, window_bounds = array<i64: 1, 128>}, {transform_indices = @transform_4, window_bounds = array<i64: 128, 128>}, {pipeline_mode = #tpu.pipeline_mode<synchronous>, transform_indices = @transform_5, window_bounds = array<i64: 1, 128>}, {pipeline_mode = #tpu.pipeline_mode<synchronous>, transform_indices = @transform_6, window_bounds = array<i64: 1, 128>}, {pipeline_mode = #tpu.pipeline_mode<synchronous>, transform_indices = @transform_7, window_bounds = array<i64: 16, 128>}]} {
    %c0_i32 = arith.constant 0 : i32
    %0 = arith.cmpi eq, %arg0, %c0_i32 : i32
    %1 = arith.extui %0 : i1 to i32
    %c0_i32_0 = arith.constant 0 : i32
    %2 = arith.cmpi ne, %1, %c0_i32_0 : i32
    scf.if %2 {
      %cst_25 = arith.constant 0.000000e+00 : f32
      %42 = vector.broadcast %cst_25 : f32 to vector<16x128xf32>
      %c0_26 = arith.constant 0 : index
      %c0_27 = arith.constant 0 : index
      %43 = vector.load %arg9[%c0_26, %c0_27] : memref<16x128xf32, #tpu.memory_space<vmem>>, vector<16x128xf32>
      tpu.vector_store %arg9[%c0_26, %c0_27], %42 {strides = array<i32>} : memref<16x128xf32, #tpu.memory_space<vmem>>, vector<16x128xf32>,
    } else {
    }
    %c0 = arith.constant 0 : index
    %c0_1 = arith.constant 0 : index
    %3 = vector.load %arg1[%c0, %c0_1] : memref<16x128xbf16, #tpu.memory_space<vmem>>, vector<16x128xbf16>
    %c0_2 = arith.constant 0 : index
    %c0_3 = arith.constant 0 : index
    %4 = vector.load %arg2[%c0_2, %c0_3] : memref<128x128xbf16, #tpu.memory_space<vmem>>, vector<128x128xbf16>
    %cst = arith.constant dense<0.000000e+00> : vector<16x128xf32>
    %5 = tpu.matmul %3, %4, %cst {dimension_numbers = #tpu.dot_dimension_numbers<[1], [0], [0], [1], [0, 0, 1, 1], [], []>} : vector<16x128xbf16>, vector<128x128xbf16>, vector<16x128xf32> -> vector<16x128xf32>
    %cst_4 = arith.constant 1.000000e+00 : f32
    %6 = vector.broadcast %cst_4 : f32 to vector<1x16xf32>
    %cst_5 = arith.constant dense<0.000000e+00> : vector<1x128xf32>
    %7 = tpu.matmul %6, %5, %cst_5 {dimension_numbers = #tpu.dot_dimension_numbers<[1], [0], [0], [1], [0, 0, 1, 1], [], []>} : vector<1x16xf32>, vector<16x128xf32>, vector<1x128xf32> -> vector<1x128xf32>
    %8 = arith.mulf %5, %5 : vector<16x128xf32>
    %cst_6 = arith.constant dense<0.000000e+00> : vector<1x128xf32>
    %9 = tpu.matmul %6, %8, %cst_6 {dimension_numbers = #tpu.dot_dimension_numbers<[1], [0], [0], [1], [0, 0, 1, 1], [], []>} : vector<1x16xf32>, vector<16x128xf32>, vector<1x128xf32> -> vector<1x128xf32>
    %cst_7 = arith.constant 6.250000e-02 : f32
    %10 = vector.broadcast %cst_7 : f32 to vector<1x128xf32>
    %11 = arith.mulf %7, %10 : vector<1x128xf32>
    %cst_8 = arith.constant 6.250000e-02 : f32
    %12 = vector.broadcast %cst_8 : f32 to vector<1x128xf32>
    %13 = arith.mulf %9, %12 : vector<1x128xf32>
    %14 = arith.mulf %11, %11 : vector<1x128xf32>
    %15 = arith.subf %13, %14 : vector<1x128xf32>
    %cst_9 = arith.constant 0.000000e+00 : f32
    %16 = vector.broadcast %cst_9 : f32 to vector<1x128xf32>
    %17 = arith.maximumf %15, %16 : vector<1x128xf32>
    %18 = vector.broadcast %11 : vector<1x128xf32> to vector<16x128xf32>
    %19 = arith.subf %5, %18 : vector<16x128xf32>
    %cst_10 = arith.constant 9.99999974E-6 : f32
    %20 = vector.broadcast %cst_10 : f32 to vector<1x128xf32>
    %21 = arith.addf %17, %20 : vector<1x128xf32>
    %22 = math.rsqrt %21 : vector<1x128xf32>
    %23 = vector.broadcast %22 : vector<1x128xf32> to vector<16x128xf32>
    %24 = arith.mulf %19, %23 : vector<16x128xf32>
    %c0_11 = arith.constant 0 : index
    %c0_12 = arith.constant 0 : index
    %25 = vector.load %arg3[%c0_11, %c0_12] : memref<1x128xf32, #tpu.memory_space<vmem>>, vector<1x128xf32>
    %26 = vector.broadcast %25 : vector<1x128xf32> to vector<16x128xf32>
    %27 = arith.mulf %24, %26 : vector<16x128xf32>
    %c0_13 = arith.constant 0 : index
    %c0_14 = arith.constant 0 : index
    %28 = vector.load %arg4[%c0_13, %c0_14] : memref<1x128xf32, #tpu.memory_space<vmem>>, vector<1x128xf32>
    %29 = vector.broadcast %28 : vector<1x128xf32> to vector<16x128xf32>
    %30 = arith.addf %27, %29 : vector<16x128xf32>
    %cst_15 = arith.constant 0.000000e+00 : f32
    %31 = vector.broadcast %cst_15 : f32 to vector<16x128xf32>
    %32 = arith.maximumf %30, %31 : vector<16x128xf32>
    %c0_16 = arith.constant 0 : index
    %c0_17 = arith.constant 0 : index
    %33 = vector.load %arg9[%c0_16, %c0_17] : memref<16x128xf32, #tpu.memory_space<vmem>>, vector<16x128xf32>
    %34 = arith.truncf %32 : vector<16x128xf32> to vector<16x128xbf16>
    %c0_18 = arith.constant 0 : index
    %c0_19 = arith.constant 0 : index
    %35 = vector.load %arg5[%c0_18, %c0_19] : memref<128x128xbf16, #tpu.memory_space<vmem>>, vector<128x128xbf16>
    %cst_20 = arith.constant dense<0.000000e+00> : vector<16x128xf32>
    %36 = tpu.matmul %34, %35, %cst_20 {dimension_numbers = #tpu.dot_dimension_numbers<[1], [0], [0], [1], [0, 0, 1, 1], [], []>} : vector<16x128xbf16>, vector<128x128xbf16>, vector<16x128xf32> -> vector<16x128xf32>
    %37 = arith.addf %33, %36 : vector<16x128xf32>
    %c0_21 = arith.constant 0 : index
    %c0_22 = arith.constant 0 : index
    %38 = vector.load %arg9[%c0_21, %c0_22] : memref<16x128xf32, #tpu.memory_space<vmem>>, vector<16x128xf32>
    tpu.vector_store %arg9[%c0_21, %c0_22], %37 {strides = array<i32>} : memref<16x128xf32, #tpu.memory_space<vmem>>, vector<16x128xf32>,
    %c1_i32 = arith.constant 1 : i32
    %39 = arith.cmpi eq, %arg0, %c1_i32 : i32
    %40 = arith.extui %39 : i1 to i32
    %cst_23 = arith.constant 6.250000e-02 : f32
    %c0_i32_24 = arith.constant 0 : i32
    %41 = arith.cmpi ne, %40, %c0_i32_24 : i32
    scf.if %41 {
      %c0_25 = arith.constant 0 : index
      %c0_26 = arith.constant 0 : index
      %42 = vector.load %arg9[%c0_25, %c0_26] : memref<16x128xf32, #tpu.memory_space<vmem>>, vector<16x128xf32>
      %cst_27 = arith.constant 1.000000e+00 : f32
      %43 = vector.broadcast %cst_27 : f32 to vector<1x16xf32>
      %cst_28 = arith.constant dense<0.000000e+00> : vector<1x128xf32>
      %44 = tpu.matmul %43, %42, %cst_28 {dimension_numbers = #tpu.dot_dimension_numbers<[1], [0], [0], [1], [0, 0, 1, 1], [], []>} : vector<1x16xf32>, vector<16x128xf32>, vector<1x128xf32> -> vector<1x128xf32>
      %45 = arith.mulf %42, %42 : vector<16x128xf32>
      %cst_29 = arith.constant dense<0.000000e+00> : vector<1x128xf32>
      %46 = tpu.matmul %43, %45, %cst_29 {dimension_numbers = #tpu.dot_dimension_numbers<[1], [0], [0], [1], [0, 0, 1, 1], [], []>} : vector<1x16xf32>, vector<16x128xf32>, vector<1x128xf32> -> vector<1x128xf32>
      %47 = vector.broadcast %cst_23 : f32 to vector<1x128xf32>
      %48 = arith.mulf %44, %47 : vector<1x128xf32>
      %49 = vector.broadcast %cst_23 : f32 to vector<1x128xf32>
      %50 = arith.mulf %46, %49 : vector<1x128xf32>
      %51 = arith.mulf %48, %48 : vector<1x128xf32>
      %52 = arith.subf %50, %51 : vector<1x128xf32>
      %cst_30 = arith.constant 0.000000e+00 : f32
      %53 = vector.broadcast %cst_30 : f32 to vector<1x128xf32>
      %54 = arith.maximumf %52, %53 : vector<1x128xf32>
      %55 = vector.broadcast %48 : vector<1x128xf32> to vector<16x128xf32>
      %56 = arith.subf %42, %55 : vector<16x128xf32>
      %cst_31 = arith.constant 9.99999974E-6 : f32
      %57 = vector.broadcast %cst_31 : f32 to vector<1x128xf32>
      %58 = arith.addf %54, %57 : vector<1x128xf32>
      %59 = math.rsqrt %58 : vector<1x128xf32>
      %60 = vector.broadcast %59 : vector<1x128xf32> to vector<16x128xf32>
      %61 = arith.mulf %56, %60 : vector<16x128xf32>
      %c0_32 = arith.constant 0 : index
      %c0_33 = arith.constant 0 : index
      %62 = vector.load %arg6[%c0_32, %c0_33] : memref<1x128xf32, #tpu.memory_space<vmem>>, vector<1x128xf32>
      %63 = vector.broadcast %62 : vector<1x128xf32> to vector<16x128xf32>
      %64 = arith.mulf %61, %63 : vector<16x128xf32>
      %c0_34 = arith.constant 0 : index
      %c0_35 = arith.constant 0 : index
      %65 = vector.load %arg7[%c0_34, %c0_35] : memref<1x128xf32, #tpu.memory_space<vmem>>, vector<1x128xf32>
      %66 = vector.broadcast %65 : vector<1x128xf32> to vector<16x128xf32>
      %67 = arith.addf %64, %66 : vector<16x128xf32>
      %c0_36 = arith.constant 0 : index
      %c0_37 = arith.constant 0 : index
      %68 = vector.load %arg8[%c0_36, %c0_37] : memref<16x128xf32, #tpu.memory_space<vmem>>, vector<16x128xf32>
      tpu.vector_store %arg8[%c0_36, %c0_37], %67 {strides = array<i32>} : memref<16x128xf32, #tpu.memory_space<vmem>>, vector<16x128xf32>,
    } else {
    }
    return
  }
  func.func @transform_0(%arg0: i32) -> (i32, i32) {
    %c0_i32 = arith.constant 0 : i32
    %c0_i32_0 = arith.constant 0 : i32
    %c0_i32_1 = arith.constant 0 : i32
    return %c0_i32, %c0_i32_0 : i32, i32
  }
  func.func @transform_1(%arg0: i32) -> (i32, i32) {
    %c0_i32 = arith.constant 0 : i32
    %c0_i32_0 = arith.constant 0 : i32
    return %c0_i32, %arg0 : i32, i32
  }
  func.func @transform_2(%arg0: i32) -> (i32, i32) {
    %c0_i32 = arith.constant 0 : i32
    %c0_i32_0 = arith.constant 0 : i32
    return %c0_i32, %arg0 : i32, i32
  }
  func.func @transform_3(%arg0: i32) -> (i32, i32) {
    %c0_i32 = arith.constant 0 : i32
    %c0_i32_0 = arith.constant 0 : i32
    return %c0_i32, %arg0 : i32, i32
  }
  func.func @transform_4(%arg0: i32) -> (i32, i32) {
    %c0_i32 = arith.constant 0 : i32
    %c0_i32_0 = arith.constant 0 : i32
    return %arg0, %c0_i32 : i32, i32
  }
  func.func @transform_5(%arg0: i32) -> (i32, i32) {
    %c0_i32 = arith.constant 0 : i32
    %c0_i32_0 = arith.constant 0 : i32
    %c0_i32_1 = arith.constant 0 : i32
    return %c0_i32, %c0_i32_0 : i32, i32
  }
  func.func @transform_6(%arg0: i32) -> (i32, i32) {
    %c0_i32 = arith.constant 0 : i32
    %c0_i32_0 = arith.constant 0 : i32
    %c0_i32_1 = arith.constant 0 : i32
    return %c0_i32, %c0_i32_0 : i32, i32
  }
  func.func @transform_7(%arg0: i32) -> (i32, i32) {
    %c0_i32 = arith.constant 0 : i32
    %c0_i32_0 = arith.constant 0 : i32
    %c0_i32_1 = arith.constant 0 : i32
    return %c0_i32, %c0_i32_0 : i32, i32
  }
}

</mosaic_0001>

<llo_original>
// kernel: tpu_custom_call.1
$region0: #{tpu_custom_call.1}
  #allocation0 [shape = 'u32[]', space=smem, size = 0x4, offset = 0x4, fixed_abs, tag = 'smem constant byte address 0x4 - core index']
  #allocation1 [shape = 'u32[72,128]{1,0:T(1,128)}', space=vmem, size = 0x9000, scoped, tag = 'internal scratch']
  #allocation2 [shape = 'f32[16,128]{1,0:T(8,128)}', space=vmem, size = 0x2000, scoped, tag = 'scratch operand']
  %s0 = inlined_call_operand.hbm [shape: bf16[16,128], index: 0, kind: input, shape index: {}]
  %s1 = inlined_call_operand.hbm [shape: bf16[128,256], index: 1, kind: input, shape index: {}]
  %s2 = inlined_call_operand.hbm [shape: f32[1,256], index: 2, kind: input, shape index: {}]
  %s3 = inlined_call_operand.vmem [shape: f32[1,256], index: 3, kind: input, shape index: {}]
  %s4 = inlined_call_operand.hbm [shape: bf16[256,128], index: 4, kind: input, shape index: {}]
  %s5 = inlined_call_operand.vmem [shape: f32[1,128], index: 5, kind: input, shape index: {}]
  %s6 = inlined_call_operand.vmem [shape: f32[1,128], index: 6, kind: input, shape index: {}]
  %s7 = inlined_call_operand.hbm [shape: f32[16,128], index: 7, kind: output, shape index: {}]
  %s8 = sld [smem:[#allocation0]]
  $region85: #{tpu_custom_call.1} parent=0
    _
  %s10 = ssub.s32 1, %s8
  %s11 = scalar_select 0, %s10, %s8
  $region1: #{tpu_custom_call.1} parent=0
    #allocation3 [shape = 'u8[4096]{0}', space=vmem, size = 0x1000, scoped, tag = 'input window, operand 0, single buffered']
    #allocation4 [shape = 's32[2]{0}', space=sflag, size = 0x8, scoped, tag = 'scoped memory for tpu_custom_call.1']
    #allocation5 [shape = 's32[2]{0}', space=sflag, size = 0x8, scoped, tag = 'scoped memory for tpu_custom_call.1']
    #allocation6 [shape = 'u8[65536]{0}', space=vmem, size = 0x10000, scoped, tag = 'input window, operand 1']
    #allocation7 [shape = 's32[2]{0}', space=sflag, size = 0x8, scoped, tag = 'scoped memory for tpu_custom_call.1']
    #allocation8 [shape = 'u8[1024]{0}', space=vmem, size = 0x400, scoped, tag = 'input window, operand 2']
    #allocation9 [shape = 'u8[65536]{0}', space=vmem, size = 0x10000, scoped, tag = 'input window, operand 4']
    #allocation10 [shape = 's32[2]{0}', space=sflag, size = 0x8, scoped, tag = 'scoped memory for tpu_custom_call.1']
    #allocation11 [shape = 'u8[8192]{0}', space=vmem, size = 0x2000, scoped, tag = 'output window, operand 0, single buffered']
    %12 = vsyncpa [#allocation4], 0
    %13 = vsyncpa [#allocation7], 0
    %s14 = scalar_lea.sflag [#allocation7], 1
    %15 = vsyncpa %s14, 0
    %16 = vsyncpa [#allocation10], 0
    %s17 = scalar_lea.sflag [#allocation10], 1
    %18 = vsyncpa %s17, 0
    %19 = vsyncpa [#allocation5], 0
    loop: start=0, step=1, limit=4
    $region2: #{tpu_custom_call.1} parent=1 // loop_pre_header
      _
    $region3: #{tpu_custom_call.1} parent=1 // loop_header
      %s21 = sphi 0, %s25
      %p22 = scmp.ge.s32.totalorder %s21, 4
      %s29 = sphi 0, %s29
      %s31 = sphi 0, %s29
      %s32 = sphi 0, %s31
      %s46 = sphi 0, %s32
      %s52 = sphi 0, %s54
      %s55 = sphi 0, %s52
      %s56 = sphi 0, %s55
      %s72 = sphi 0, %s56
      %s78 = sphi 0, %s80
      %s81 = sphi 0, %s78
      %s82 = sphi 0, %s81
      %s98 = sphi 0, %s82
      %s104 = sphi 0, %s106
      %s107 = sphi 0, %s104
      %s108 = sphi 0, %s107
      %s124 = sphi 0, %s108
      %s130 = sphi 0, %s132
      %s133 = sphi 0, %s130
      %s134 = sphi 0, %s133
      %s150 = sphi 0, %s134
      %s154 = sphi 0, %s154
      %s156 = sphi 0, %s154
      %s157 = sphi 0, %s156
      %s171 = sphi 0, %s157
      %s175 = sphi 0, %s175
      %s177 = sphi 0, %s175
      %s178 = sphi 0, %s177
      %s192 = sphi 0, %s178
      %s196 = sphi 0, %s196
      %s198 = sphi 0, %s196
      %s199 = sphi 0, %s198
      %s213 = sphi 0, %s199
    $region4: #{tpu_custom_call.1} parent=1 // loop_header_branch
      %24 = sbr.rel (%p22) target = $region8
    $region5: #{tpu_custom_call.1} parent=1 // loop_body
      %s26 = ssub.s32 %s21, 1
      %s27 = ssub.s32 %s21, 2
      %s28 = sadd.s32 %s21, 1
      %s30 = sadd.s32 %s29, 1
      %p33 = scmp.eq.s32.totalorder %s21, 1
      %p34 = scmp.ne.s32.totalorder %s29, %s31
      %p35 = scmp.eq.s32.totalorder %s21, 0
      %p36 = por %p34, %p35
      %p37 = scmp.ne.s32.totalorder %s29, %s31
      %p38 = scmp.eq.s32.totalorder %s26, 1
      %p39 = por %p37, %p38
      %p40 = scmp.ne.s32.totalorder %s31, %s32
      %p41 = scmp.eq.s32.totalorder %s26, 0
      %p42 = por %p40, %p41
      %p43 = scmp.ne.s32.totalorder %s31, %s32
      %p44 = scmp.eq.s32.totalorder %s27, 1
      %p45 = por %p43, %p44
      %p47 = scmp.ne.s32.totalorder %s32, %s46
      %p48 = scmp.eq.s32.totalorder %s27, 0
      %p49 = por %p47, %p48
      %s50 = ssub.s32 %s21, %s28
      %p51 = scmp.eq.s32.totalorder %s50, 0
      %s53 = sadd.s32 %s52, 1
      %s54 = scalar_select %p51, %s52, %s53
      %p57 = pneg %p51
      %p58 = scmp.eq.s32.totalorder %s21, 1
      %p59 = por %p57, %p58
      %p60 = scmp.ne.s32.totalorder %s52, %s55
      %p61 = scmp.eq.s32.totalorder %s21, 0
      %p62 = por %p60, %p61
      %p63 = scmp.ne.s32.totalorder %s52, %s55
      %p64 = scmp.eq.s32.totalorder %s26, 1
      %p65 = por %p63, %p64
      %p66 = scmp.ne.s32.totalorder %s55, %s56
      %p67 = scmp.eq.s32.totalorder %s26, 0
      %p68 = por %p66, %p67
      %p69 = scmp.ne.s32.totalorder %s55, %s56
      %p70 = scmp.eq.s32.totalorder %s27, 1
      %p71 = por %p69, %p70
      %p73 = scmp.ne.s32.totalorder %s56, %s72
      %p74 = scmp.eq.s32.totalorder %s27, 0
      %p75 = por %p73, %p74
      %s76 = ssub.s32 %s21, %s28
      %p77 = scmp.eq.s32.totalorder %s76, 0
      %s79 = sadd.s32 %s78, 1
      %s80 = scalar_select %p77, %s78, %s79
      %p83 = pneg %p77
      %p84 = scmp.eq.s32.totalorder %s21, 1
      %p85 = por %p83, %p84
      %p86 = scmp.ne.s32.totalorder %s78, %s81
      %p87 = scmp.eq.s32.totalorder %s21, 0
      %p88 = por %p86, %p87
      %p89 = scmp.ne.s32.totalorder %s78, %s81
      %p90 = scmp.eq.s32.totalorder %s26, 1
      %p91 = por %p89, %p90
      %p92 = scmp.ne.s32.totalorder %s81, %s82
      %p93 = scmp.eq.s32.totalorder %s26, 0
      %p94 = por %p92, %p93
      %p95 = scmp.ne.s32.totalorder %s81, %s82
      %p96 = scmp.eq.s32.totalorder %s27, 1
      %p97 = por %p95, %p96
      %p99 = scmp.ne.s32.totalorder %s82, %s98
      %p100 = scmp.eq.s32.totalorder %s27, 0
      %p101 = por %p99, %p100
      %s102 = ssub.s32 %s21, %s28
      %p103 = scmp.eq.s32.totalorder %s102, 0
      %s105 = sadd.s32 %s104, 1
      %s106 = scalar_select %p103, %s104, %s105
      %p109 = pneg %p103
      %p110 = scmp.eq.s32.totalorder %s21, 1
      %p111 = por %p109, %p110
      %p112 = scmp.ne.s32.totalorder %s104, %s107
      %p113 = scmp.eq.s32.totalorder %s21, 0
      %p114 = por %p112, %p113
      %p115 = scmp.ne.s32.totalorder %s104, %s107
      %p116 = scmp.eq.s32.totalorder %s26, 1
      %p117 = por %p115, %p116
      %p118 = scmp.ne.s32.totalorder %s107, %s108
      %p119 = scmp.eq.s32.totalorder %s26, 0
      %p120 = por %p118, %p119
      %p121 = scmp.ne.s32.totalorder %s107, %s108
      %p122 = scmp.eq.s32.totalorder %s27, 1
      %p123 = por %p121, %p122
      %p125 = scmp.ne.s32.totalorder %s108, %s124
      %p126 = scmp.eq.s32.totalorder %s27, 0
      %p127 = por %p125, %p126
      %s128 = ssub.s32 %s21, %s28
      %p129 = scmp.eq.s32.totalorder %s128, 0
      %s131 = sadd.s32 %s130, 1
      %s132 = scalar_select %p129, %s130, %s131
      %p135 = pneg %p129
      %p136 = scmp.eq.s32.totalorder %s21, 1
      %p137 = por %p135, %p136
      %p138 = scmp.ne.s32.totalorder %s130, %s133
      %p139 = scmp.eq.s32.totalorder %s21, 0
      %p140 = por %p138, %p139
      %p141 = scmp.ne.s32.totalorder %s130, %s133
      %p142 = scmp.eq.s32.totalorder %s26, 1
      %p143 = por %p141, %p142
      %p144 = scmp.ne.s32.totalorder %s133, %s134
      %p145 = scmp.eq.s32.totalorder %s26, 0
      %p146 = por %p144, %p145
      %p147 = scmp.ne.s32.totalorder %s133, %s134
      %p148 = scmp.eq.s32.totalorder %s27, 1
      %p149 = por %p147, %p148
      %p151 = scmp.ne.s32.totalorder %s134, %s150
      %p152 = scmp.eq.s32.totalorder %s27, 0
      %p153 = por %p151, %p152
      %s155 = sadd.s32 %s154, 1
      %p158 = scmp.eq.s32.totalorder %s21, 1
      %p159 = scmp.ne.s32.totalorder %s154, %s156
      %p160 = scmp.eq.s32.totalorder %s21, 0
      %p161 = por %p159, %p160
      %p162 = scmp.ne.s32.totalorder %s154, %s156
      %p163 = scmp.eq.s32.totalorder %s26, 1
      %p164 = por %p162, %p163
      %p165 = scmp.ne.s32.totalorder %s156, %s157
      %p166 = scmp.eq.s32.totalorder %s26, 0
      %p167 = por %p165, %p166
      %p168 = scmp.ne.s32.totalorder %s156, %s157
      %p169 = scmp.eq.s32.totalorder %s27, 1
      %p170 = por %p168, %p169
      %p172 = scmp.ne.s32.totalorder %s157, %s171
      %p173 = scmp.eq.s32.totalorder %s27, 0
      %p174 = por %p172, %p173
      %s176 = sadd.s32 %s175, 1
      %p179 = scmp.eq.s32.totalorder %s21, 1
      %p180 = scmp.ne.s32.totalorder %s175, %s177
      %p181 = scmp.eq.s32.totalorder %s21, 0
      %p182 = por %p180, %p181
      %p183 = scmp.ne.s32.totalorder %s175, %s177
      %p184 = scmp.eq.s32.totalorder %s26, 1
      %p185 = por %p183, %p184
      %p186 = scmp.ne.s32.totalorder %s177, %s178
      %p187 = scmp.eq.s32.totalorder %s26, 0
      %p188 = por %p186, %p187
      %p189 = scmp.ne.s32.totalorder %s177, %s178
      %p190 = scmp.eq.s32.totalorder %s27, 1
      %p191 = por %p189, %p190
      %p193 = scmp.ne.s32.totalorder %s178, %s192
      %p194 = scmp.eq.s32.totalorder %s27, 0
      %p195 = por %p193, %p194
      %s197 = sadd.s32 %s196, 1
      %p200 = scmp.eq.s32.totalorder %s21, 1
      %p201 = scmp.ne.s32.totalorder %s196, %s198
      %p202 = scmp.eq.s32.totalorder %s21, 0
      %p203 = por %p201, %p202
      %p204 = scmp.ne.s32.totalorder %s196, %s198
      %p205 = scmp.eq.s32.totalorder %s26, 1
      %p206 = por %p204, %p205
      %p207 = scmp.ne.s32.totalorder %s198, %s199
      %p208 = scmp.eq.s32.totalorder %s26, 0
      %p209 = por %p207, %p208
      %p210 = scmp.ne.s32.totalorder %s198, %s199
      %p211 = scmp.eq.s32.totalorder %s27, 1
      %p212 = por %p210, %p211
      %p214 = scmp.ne.s32.totalorder %s199, %s213
      %p215 = scmp.eq.s32.totalorder %s27, 0
      %p216 = por %p214, %p215
      %p217 = scmp.le.s32.totalorder 1, %s21
      %p218 = scmp.lt.s32.totalorder %s21, 3
      %p219 = pnand %p217, %p218
      %p220 = pneg %p219
      // Predicated region
      $region9: #{tpu_custom_call.1} parent=5 // pred_check
        _
      $region10: #{tpu_custom_call.1} parent=5 // pred_check_branch
        %222 = sbr.rel (%p219) target = $region12
      $region11: #{tpu_custom_call.1} parent=5 // pred_region
        %s223 = ssub.s32 %s21, 1
        // Predicated region
        $region13: #{tpu_custom_call.1} parent=11 // pred_check
          %p224 = pneg %p42
        $region14: #{tpu_custom_call.1} parent=11 // pred_check_branch
          %226 = sbr.rel (%p224) target = $region16
        $region15: #{tpu_custom_call.1} parent=11 // pred_region
          %228 = vsyncadd [#allocation4], 0
          %s229 = sshll.u32 %s0, 4
          %s230 = int_to_ptr.hbm [resolvable:$true] %s229
          %s231 = sshll.u32 [#allocation3], 4
          %s232 = int_to_ptr.vmem [resolvable:$true] %s231
          %237 = dma.hbm_to_vmem [thread:$0]  %s230, 128, %s232, [#allocation4], 64, 64, 4
        $region16: #{tpu_custom_call.1} parent=11 // pred_fallthru
          _
        // Predicated region
        $region17: #{tpu_custom_call.1} parent=11 // pred_check
          %p238 = pneg %p167
        $region18: #{tpu_custom_call.1} parent=11 // pred_check_branch
          %240 = sbr.rel (%p238) target = $region20
        $region19: #{tpu_custom_call.1} parent=11 // pred_region
          _
        $region20: #{tpu_custom_call.1} parent=11 // pred_fallthru
          _
        // Predicated region
        $region21: #{tpu_custom_call.1} parent=11 // pred_check
          %p241 = pneg %p188
        $region22: #{tpu_custom_call.1} parent=11 // pred_check_branch
          %243 = sbr.rel (%p241) target = $region24
        $region23: #{tpu_custom_call.1} parent=11 // pred_region
          _
        $region24: #{tpu_custom_call.1} parent=11 // pred_fallthru
          _
      $region12: #{tpu_custom_call.1} parent=5 // pred_fallthru
        _
      %p244 = scmp.lt.s32.totalorder %s21, 2
      // Predicated region
      $region25: #{tpu_custom_call.1} parent=5 // pred_check
        %p245 = pneg %p244
      $region26: #{tpu_custom_call.1} parent=5 // pred_check_branch
        %247 = sbr.rel (%p245) target = $region28
      $region27: #{tpu_custom_call.1} parent=5 // pred_region
        // Predicated region
        $region29: #{tpu_custom_call.1} parent=27 // pred_check
          %p248 = pneg %p62
        $region30: #{tpu_custom_call.1} parent=27 // pred_check_branch
          %250 = sbr.rel (%p248) target = $region32
        $region31: #{tpu_custom_call.1} parent=27 // pred_region
          %s251 = sand.u32 %s21, 1
          %s252 = scalar_lea.sflag [#allocation7], %s251
          %s253 = sand.u32 %s52, 1
          %s254 = smul.addr %s253, 64
          %s255 = scalar_lea.vmem [#allocation6], %s254
          %257 = vsyncadd %s252, 0
          %s258 = smul.addr %s21, 4
          %s259 = scalar_lea.hbm %s1, %s258
          %s260 = sshll.u32 %s259, 4
          %s261 = int_to_ptr.hbm [resolvable:$true] %s260
          %s262 = sshll.u32 %s255, 4
          %s263 = int_to_ptr.vmem [resolvable:$true] %s262
          %268 = dma.hbm_to_vmem [thread:$0]  %s261, 1024, %s263, %s252, 128, 64, 4
        $region32: #{tpu_custom_call.1} parent=27 // pred_fallthru
          _
        // Predicated region
        $region33: #{tpu_custom_call.1} parent=27 // pred_check
          %p269 = pneg %p88
        $region34: #{tpu_custom_call.1} parent=27 // pred_check_branch
          %271 = sbr.rel (%p269) target = $region36
        $region35: #{tpu_custom_call.1} parent=27 // pred_region
          %s272 = sand.u32 %s21, 1
          %s273 = scalar_lea.sflag [#allocation7], %s272
          %s274 = sand.u32 %s78, 1
          %s275 = scalar_lea.vmem [#allocation8], %s274
          %277 = vsyncadd %s273, 0
          %s278 = scalar_lea.hbm %s2, %s21
          %s280 = sshll.u32 %s278, 4
          %s281 = int_to_ptr.hbm [resolvable:$true] %s280
          %s282 = sshll.u32 %s275, 4
          %s283 = int_to_ptr.vmem [resolvable:$true] %s282
          %285 = dma.hbm_to_vmem [thread:$0]  %s281, 16, %s283, %s273
        $region36: #{tpu_custom_call.1} parent=27 // pred_fallthru
          _
        // Predicated region
        $region37: #{tpu_custom_call.1} parent=27 // pred_check
          %p286 = pneg %p114
        $region38: #{tpu_custom_call.1} parent=27 // pred_check_branch
          %288 = sbr.rel (%p286) target = $region40
        $region39: #{tpu_custom_call.1} parent=27 // pred_region
          %p289 = scmp.lt.s32.totalorder %s21, 1
          %s290 = scalar_select %p289, %s21, 1
          %s291 = scalar_lea.vmem %s3, %s290
        $region40: #{tpu_custom_call.1} parent=27 // pred_fallthru
          _
        // Predicated region
        $region41: #{tpu_custom_call.1} parent=27 // pred_check
          %p292 = pneg %p140
        $region42: #{tpu_custom_call.1} parent=27 // pred_check_branch
          %294 = sbr.rel (%p292) target = $region44
        $region43: #{tpu_custom_call.1} parent=27 // pred_region
          %s295 = sand.u32 %s130, 1
          %s296 = scalar_lea.sflag [#allocation10], %s295
          %s297 = sand.u32 %s130, 1
          %s298 = smul.addr %s297, 64
          %s299 = scalar_lea.vmem [#allocation9], %s298
          %s300 = smul.u32 16, %s21
          %302 = vsyncadd %s296, 0
          %s303 = smul.addr %s300, 4
          %s304 = scalar_lea.hbm %s4, %s303
          %s305 = sshll.u32 %s304, 4
          %s306 = int_to_ptr.hbm [resolvable:$true] %s305
          %s307 = sshll.u32 %s299, 4
          %s308 = int_to_ptr.vmem [resolvable:$true] %s307
          %313 = dma.hbm_to_vmem [thread:$0]  %s306, 1024, %s308, %s296, 64, 64, 4
        $region44: #{tpu_custom_call.1} parent=27 // pred_fallthru
          _
      $region28: #{tpu_custom_call.1} parent=5 // pred_fallthru
        _
      %p314 = scmp.le.s32.totalorder 1, %s21
      %p315 = scmp.lt.s32.totalorder %s21, 3
      %p316 = pnand %p314, %p315
      %p317 = pneg %p316
      // Predicated region
      $region45: #{tpu_custom_call.1} parent=5 // pred_check
        _
      $region46: #{tpu_custom_call.1} parent=5 // pred_check_branch
        %319 = sbr.rel (%p316) target = $region48
      $region47: #{tpu_custom_call.1} parent=5 // pred_region
        %s320 = ssub.s32 %s21, 1
        // Predicated region
        $region49: #{tpu_custom_call.1} parent=47 // pred_check
          %p321 = pneg %p42
        $region50: #{tpu_custom_call.1} parent=47 // pred_check_branch
          %323 = sbr.rel (%p321) target = $region52
        $region51: #{tpu_custom_call.1} parent=47 // pred_region
          %325 = dma.done [#allocation4], 128
        $region52: #{tpu_custom_call.1} parent=47 // pred_fallthru
          _
        %s326 = sand.u32 %s26, 1
        %s327 = scalar_lea.sflag [#allocation7], %s326
        %s328 = sand.u32 %s55, 1
        %s329 = smul.addr %s328, 64
        %s330 = scalar_lea.vmem [#allocation6], %s329
        // Predicated region
        $region53: #{tpu_custom_call.1} parent=47 // pred_check
          %p331 = pneg %p68
        $region54: #{tpu_custom_call.1} parent=47 // pred_check_branch
          %333 = sbr.rel (%p331) target = $region56
        $region55: #{tpu_custom_call.1} parent=47 // pred_region
          %335 = dma.done %s327, 1024
        $region56: #{tpu_custom_call.1} parent=47 // pred_fallthru
          _
        %s336 = sand.u32 %s26, 1
        %s337 = scalar_lea.sflag [#allocation7], %s336
        %s338 = sand.u32 %s81, 1
        %s339 = scalar_lea.vmem [#allocation8], %s338
        // Predicated region
        $region57: #{tpu_custom_call.1} parent=47 // pred_check
          %p340 = pneg %p94
        $region58: #{tpu_custom_call.1} parent=47 // pred_check_branch
          %342 = sbr.rel (%p340) target = $region60
        $region59: #{tpu_custom_call.1} parent=47 // pred_region
          %344 = dma.done %s337, 16
        $region60: #{tpu_custom_call.1} parent=47 // pred_fallthru
          _
        %s345 = sand.u32 %s133, 1
        %s346 = scalar_lea.sflag [#allocation10], %s345
        %s347 = sand.u32 %s133, 1
        %s348 = smul.addr %s347, 64
        %s349 = scalar_lea.vmem [#allocation9], %s348
        // Predicated region
        $region61: #{tpu_custom_call.1} parent=47 // pred_check
          %p350 = pneg %p146
        $region62: #{tpu_custom_call.1} parent=47 // pred_check_branch
          %352 = sbr.rel (%p350) target = $region64
        $region63: #{tpu_custom_call.1} parent=47 // pred_region
          %354 = dma.done %s346, 1024
        $region64: #{tpu_custom_call.1} parent=47 // pred_fallthru
          _
        %p355 = pneg %p42
        %p356 = pneg %p39
        %s357 = sand.u32 %s26, 1
        %s358 = scalar_lea.sflag [#allocation7], %s357
        %s359 = sand.u32 %s55, 1
        %s360 = smul.addr %s359, 64
        %s361 = scalar_lea.vmem [#allocation6], %s360
        %p362 = pneg %p68
        %p363 = pneg %p65
        %s364 = sand.u32 %s26, 1
        %s365 = scalar_lea.sflag [#allocation7], %s364
        %s366 = sand.u32 %s81, 1
        %s367 = scalar_lea.vmem [#allocation8], %s366
        %p368 = pneg %p94
        %p369 = pneg %p91
        %p370 = scmp.lt.s32.totalorder %s26, 1
        %s371 = scalar_select %p370, %s26, 1
        %s372 = scalar_lea.vmem %s3, %s371
        %p373 = pneg %p120
        %p374 = pneg %p117
        %s375 = sand.u32 %s133, 1
        %s376 = scalar_lea.sflag [#allocation10], %s375
        %s377 = sand.u32 %s133, 1
        %s378 = smul.addr %s377, 64
        %s379 = scalar_lea.vmem [#allocation9], %s378
        %p380 = pneg %p146
        %p381 = pneg %p143
        %p382 = pneg %p167
        %p383 = pneg %p164
        %p384 = pneg %p188
        %p385 = pneg %p185
        %p386 = pneg %p209
        %p387 = pneg %p206
        %p388 = scmp.lt.s32.totalorder %s26, 1
        %s389 = scalar_select %p388, %s26, 1
        %s390 = scalar_lea.vmem %s3, %s389
        %s391 = smul.u32 16, %s26
        %p392 = scmp.eq.s32.totalorder %s26, 0
        // Predicated region
        $region65: #{tpu_custom_call.1} parent=47 // pred_check
          %p393 = pneg %p392
        $region66: #{tpu_custom_call.1} parent=47 // pred_check_branch
          %395 = sbr.rel (%p393) target = $region68
        $region67: #{tpu_custom_call.1} parent=47 // pred_region
          %396 = vst [vmem:[#allocation2] sm:$0xff] 0.0
          %397 = vst [vmem:[#allocation2 + $0x8] sm:$0xff] 0.0
        $region68: #{tpu_custom_call.1} parent=47 // pred_fallthru
          _
        %v398 = vld [vmem:[#allocation3] sm:$0xf]
        %v399 = vld [vmem:[#allocation3 + $0x4] sm:$0xf]
        %v400 = vld [vmem:[%s330] sm:$0xf]
        %v401 = vld [vmem:[%s330 + $0x4] sm:$0xf]
        %v402 = vld [vmem:[%s330 + $0x8] sm:$0xf]
        %v403 = vld [vmem:[%s330 + $0xc] sm:$0xf]
        %v404 = vld [vmem:[%s330 + $0x10] sm:$0xf]
        %v405 = vld [vmem:[%s330 + $0x14] sm:$0xf]
        %v406 = vld [vmem:[%s330 + $0x18] sm:$0xf]
        %v407 = vld [vmem:[%s330 + $0x1c] sm:$0xf]
        %v408 = vld [vmem:[%s330 + $0x20] sm:$0xf]
        %v409 = vld [vmem:[%s330 + $0x24] sm:$0xf]
        %v410 = vld [vmem:[%s330 + $0x28] sm:$0xf]
        %v411 = vld [vmem:[%s330 + $0x2c] sm:$0xf]
        %v412 = vld [vmem:[%s330 + $0x30] sm:$0xf]
        %v413 = vld [vmem:[%s330 + $0x34] sm:$0xf]
        %v414 = vld [vmem:[%s330 + $0x38] sm:$0xf]
        %v415 = vld [vmem:[%s330 + $0x3c] sm:$0xf]
        %v418 = vunpack.c.l.b16 %v398
        %v419 = vunpack.c.l.b16 %v399
        %v420 = vpack.c.b16 %v419, %v418
        %v438 = vunpack.c.l.b16 %v400
        %v439 = vunpack.c.l.b16 %v401
        %v440 = vunpack.c.l.b16 %v402
        %v441 = vunpack.c.l.b16 %v403
        %v442 = vunpack.c.l.b16 %v404
        %v443 = vunpack.c.l.b16 %v405
        %v444 = vunpack.c.l.b16 %v406
        %v445 = vunpack.c.l.b16 %v407
        %v446 = vunpack.c.l.b16 %v408
        %v447 = vunpack.c.l.b16 %v409
        %v448 = vunpack.c.l.b16 %v410
        %v449 = vunpack.c.l.b16 %v411
        %v450 = vunpack.c.l.b16 %v412
        %v451 = vunpack.c.l.b16 %v413
        %v452 = vunpack.c.l.b16 %v414
        %v453 = vunpack.c.l.b16 %v415
        %v454 = vpack.c.b16 %v439, %v438
        %v455 = vpack.c.b16 %v441, %v440
        %v456 = vpack.c.b16 %v443, %v442
        %v457 = vpack.c.b16 %v445, %v444
        %v458 = vpack.c.b16 %v447, %v446
        %v459 = vpack.c.b16 %v449, %v448
        %v460 = vpack.c.b16 %v451, %v450
        %v461 = vpack.c.b16 %v453, %v452
        %470 = vmatpush.bf16.msra.mxu0 %v461
        %471 = vmatpush.bf16.msra.mxu0 %v460
        %472 = vmatpush.bf16.msra.mxu0 %v459
        %473 = vmatpush.bf16.msra.mxu0 %v458
        %474 = vmatpush.bf16.msra.mxu0 %v457
        %475 = vmatpush.bf16.msra.mxu0 %v456
        %476 = vmatpush.bf16.msra.mxu0 %v455
        %477 = vmatpush.bf16.msra.mxu0 %v454
        %478 = vmatmul.bf16.gmra.mxu0 %v420
        %v479 = vpop.f32.mrf.mxu0
        %v480 = vadd.f32 0.0, %v479
        %v481 = vpop.f32.mrf.mxu0
        %v482 = vadd.f32 0.0, %v481
        %483 = vdwg.mxu0
        %vm484 = vcmask 130048
        %v486 = vsel %vm484, 1.0, 0
        %488 = vmatpush.msra.mxu0 0.0
        %489 = vmatpush.msra.mxu0 0.0
        %490 = vmatpush.msra.mxu0 0.0
        %491 = vmatpush.msra.mxu0 0.0
        %492 = vmatpush.msra.mxu0 0.0
        %493 = vmatpush.msra.mxu0 0.0
        %494 = vmatpush.msra.mxu0 0.0
        %495 = vmatpush.msra.mxu0 0.0
        %496 = vmatpush.msra.mxu0 0.0
        %497 = vmatpush.msra.mxu0 0.0
        %498 = vmatpush.msra.mxu0 0.0
        %499 = vmatpush.msra.mxu0 0.0
        %500 = vmatpush.msra.mxu0 0.0
        %501 = vmatpush.msra.mxu0 0.0
        %502 = vmatpush.msra.mxu0 %v482
        %503 = vmatpush.msra.mxu0 %v480
        %504 = vmatmul.f32.gmra.mxu0 %v486
        %v505 = vpop.f32.mrf.mxu0
        %v506 = vadd.f32 0.0, %v505
        %507 = vdwg.mxu0
        %v508 = vmul.f32 %v480, %v480
        %v509 = vmul.f32 %v482, %v482
        %510 = vmatpush.msra.mxu0 0.0
        %511 = vmatpush.msra.mxu0 0.0
        %512 = vmatpush.msra.mxu0 0.0
        %513 = vmatpush.msra.mxu0 0.0
        %514 = vmatpush.msra.mxu0 0.0
        %515 = vmatpush.msra.mxu0 0.0
        %516 = vmatpush.msra.mxu0 0.0
        %517 = vmatpush.msra.mxu0 0.0
        %518 = vmatpush.msra.mxu0 0.0
        %519 = vmatpush.msra.mxu0 0.0
        %520 = vmatpush.msra.mxu0 0.0
        %521 = vmatpush.msra.mxu0 0.0
        %522 = vmatpush.msra.mxu0 0.0
        %523 = vmatpush.msra.mxu0 0.0
        %524 = vmatpush.msra.mxu0 %v509
        %525 = vmatpush.msra.mxu0 %v508
        %526 = vmatmul.f32.gmra.mxu0 %v486
        %v527 = vpop.f32.mrf.mxu0
        %v528 = vadd.f32 0.0, %v527
        %529 = vdwg.mxu0
        %v530 = vmul.f32 %v506, 0.0625
        %v531 = vmul.f32 %v528, 0.0625
        %v532 = vmul.f32 %v530, %v530
        %v533 = vsub.f32 %v531, %v532
        %v534 = vmax.f32 %v533, 0.0
        %v535 = vperm.slane %v530, 0
        %v536 = vsub.f32 %v480, %v535
        %v537 = vsub.f32 %v482, %v535
        %v538 = vadd.f32 %v534, 1e-05
        %v539 = vrsqrt.pop %v538
        %v540 = vmul.f32 %v539, %v538
        %v541 = vmul.f32 %v540, %v539
        %v542 = vmul.f32 0.5, %v541
        %v543 = vsub.f32 1.5, %v542
        %v544 = vmul.f32 %v539, %v543
        %vm545 = vweird.f32 %v538
        %vm546 = vweird.f32 %v539
        %vm547 = vmor %vm545, %vm546
        %v548 = vsel %vm547, %v539, %v544
        %v549 = vperm.slane %v548, 0
        %v550 = vmul.f32 %v536, %v549
        %v551 = vmul.f32 %v537, %v549
        %v552 = vld [vmem:[%s339] sm:$0x1]
        %v554 = vperm.slane %v552, 0
        %v556 = vmul.f32 %v550, %v554
        %v557 = vmul.f32 %v551, %v554
        %v558 = vld [vmem:[%s390] sm:$0x1]
        %v560 = vperm.slane %v558, 0
        %v562 = vadd.f32 %v556, %v560
        %v563 = vadd.f32 %v557, %v560
        %v564 = vmax.f32 %v562, 0.0
        %v565 = vmax.f32 %v563, 0.0
        %v566 = vld [vmem:[#allocation2] sm:$0xff]
        %v567 = vld [vmem:[#allocation2 + $0x8] sm:$0xff]
        %v568 = vpack.c.bf16 %v565, %v564
        %v569 = vld [vmem:[%s349] sm:$0xf]
        %v570 = vld [vmem:[%s349 + $0x4] sm:$0xf]
        %v571 = vld [vmem:[%s349 + $0x8] sm:$0xf]
        %v572 = vld [vmem:[%s349 + $0xc] sm:$0xf]
        %v573 = vld [vmem:[%s349 + $0x10] sm:$0xf]
        %v574 = vld [vmem:[%s349 + $0x14] sm:$0xf]
        %v575 = vld [vmem:[%s349 + $0x18] sm:$0xf]
        %v576 = vld [vmem:[%s349 + $0x1c] sm:$0xf]
        %v577 = vld [vmem:[%s349 + $0x20] sm:$0xf]
        %v578 = vld [vmem:[%s349 + $0x24] sm:$0xf]
        %v579 = vld [vmem:[%s349 + $0x28] sm:$0xf]
        %v580 = vld [vmem:[%s349 + $0x2c] sm:$0xf]
        %v581 = vld [vmem:[%s349 + $0x30] sm:$0xf]
        %v582 = vld [vmem:[%s349 + $0x34] sm:$0xf]
        %v583 = vld [vmem:[%s349 + $0x38] sm:$0xf]
        %v584 = vld [vmem:[%s349 + $0x3c] sm:$0xf]
        %v601 = vunpack.c.l.b16 %v569
        %v602 = vunpack.c.l.b16 %v570
        %v603 = vunpack.c.l.b16 %v571
        %v604 = vunpack.c.l.b16 %v572
        %v605 = vunpack.c.l.b16 %v573
        %v606 = vunpack.c.l.b16 %v574
        %v607 = vunpack.c.l.b16 %v575
        %v608 = vunpack.c.l.b16 %v576
        %v609 = vunpack.c.l.b16 %v577
        %v610 = vunpack.c.l.b16 %v578
        %v611 = vunpack.c.l.b16 %v579
        %v612 = vunpack.c.l.b16 %v580
        %v613 = vunpack.c.l.b16 %v581
        %v614 = vunpack.c.l.b16 %v582
        %v615 = vunpack.c.l.b16 %v583
        %v616 = vunpack.c.l.b16 %v584
        %v617 = vpack.c.b16 %v602, %v601
        %v618 = vpack.c.b16 %v604, %v603
        %v619 = vpack.c.b16 %v606, %v605
        %v620 = vpack.c.b16 %v608, %v607
        %v621 = vpack.c.b16 %v610, %v609
        %v622 = vpack.c.b16 %v612, %v611
        %v623 = vpack.c.b16 %v614, %v613
        %v624 = vpack.c.b16 %v616, %v615
        %633 = vmatpush.bf16.msra.mxu0 %v624
        %634 = vmatpush.bf16.msra.mxu0 %v623
        %635 = vmatpush.bf16.msra.mxu0 %v622
        %636 = vmatpush.bf16.msra.mxu0 %v621
        %637 = vmatpush.bf16.msra.mxu0 %v620
        %638 = vmatpush.bf16.msra.mxu0 %v619
        %639 = vmatpush.bf16.msra.mxu0 %v618
        %640 = vmatpush.bf16.msra.mxu0 %v617
        %641 = vmatmul.bf16.gmra.mxu0 %v568
        %v642 = vpop.f32.mrf.mxu0
        %v643 = vadd.f32 0.0, %v642
        %v644 = vpop.f32.mrf.mxu0
        %v645 = vadd.f32 0.0, %v644
        %646 = vdwg.mxu0
        %v647 = vadd.f32 %v566, %v643
        %v648 = vadd.f32 %v567, %v645
        %649 = vst [vmem:[#allocation2] sm:$0xff] %v647
        %650 = vst [vmem:[#allocation2 + $0x8] sm:$0xff] %v648
        %p651 = scmp.eq.s32.totalorder %s26, 1
        // Predicated region
        $region69: #{tpu_custom_call.1} parent=47 // pred_check
          %p652 = pneg %p651
        $region70: #{tpu_custom_call.1} parent=47 // pred_check_branch
          %654 = sbr.rel (%p652) target = $region72
        $region71: #{tpu_custom_call.1} parent=47 // pred_region
          %v655 = vld [vmem:[#allocation2] sm:$0xff]
          %v656 = vld [vmem:[#allocation2 + $0x8] sm:$0xff]
          %657 = vmatpush.msra.mxu0 0.0
          %658 = vmatpush.msra.mxu0 0.0
          %659 = vmatpush.msra.mxu0 0.0
          %660 = vmatpush.msra.mxu0 0.0
          %661 = vmatpush.msra.mxu0 0.0
          %662 = vmatpush.msra.mxu0 0.0
          %663 = vmatpush.msra.mxu0 0.0
          %664 = vmatpush.msra.mxu0 0.0
          %665 = vmatpush.msra.mxu0 0.0
          %666 = vmatpush.msra.mxu0 0.0
          %667 = vmatpush.msra.mxu0 0.0
          %668 = vmatpush.msra.mxu0 0.0
          %669 = vmatpush.msra.mxu0 0.0
          %670 = vmatpush.msra.mxu0 0.0
          %671 = vmatpush.msra.mxu0 %v656
          %672 = vmatpush.msra.mxu0 %v655
          %673 = vmatmul.f32.gmra.mxu0 %v486
          %v674 = vpop.f32.mrf.mxu0
          %v675 = vadd.f32 0.0, %v674
          %676 = vdwg.mxu0
          %v677 = vmul.f32 %v655, %v655
          %v678 = vmul.f32 %v656, %v656
          %679 = vmatpush.msra.mxu0 0.0
          %680 = vmatpush.msra.mxu0 0.0
          %681 = vmatpush.msra.mxu0 0.0
          %682 = vmatpush.msra.mxu0 0.0
          %683 = vmatpush.msra.mxu0 0.0
          %684 = vmatpush.msra.mxu0 0.0
          %685 = vmatpush.msra.mxu0 0.0
          %686 = vmatpush.msra.mxu0 0.0
          %687 = vmatpush.msra.mxu0 0.0
          %688 = vmatpush.msra.mxu0 0.0
          %689 = vmatpush.msra.mxu0 0.0
          %690 = vmatpush.msra.mxu0 0.0
          %691 = vmatpush.msra.mxu0 0.0
          %692 = vmatpush.msra.mxu0 0.0
          %693 = vmatpush.msra.mxu0 %v678
          %694 = vmatpush.msra.mxu0 %v677
          %695 = vmatmul.f32.gmra.mxu0 %v486
          %v696 = vpop.f32.mrf.mxu0
          %v697 = vadd.f32 0.0, %v696
          %698 = vdwg.mxu0
          %v699 = vmul.f32 %v675, 0.0625
          %v700 = vmul.f32 %v697, 0.0625
          %v701 = vmul.f32 %v699, %v699
          %v702 = vsub.f32 %v700, %v701
          %v703 = vmax.f32 %v702, 0.0
          %v704 = vperm.slane %v699, 0
          %v705 = vsub.f32 %v655, %v704
          %v706 = vsub.f32 %v656, %v704
          %v707 = vadd.f32 %v703, 1e-05
          %v708 = vrsqrt.pop %v707
          %v709 = vmul.f32 %v708, %v707
          %v710 = vmul.f32 %v709, %v708
          %v711 = vmul.f32 0.5, %v710
          %v712 = vsub.f32 1.5, %v711
          %v713 = vmul.f32 %v708, %v712
          %vm714 = vweird.f32 %v707
          %vm715 = vweird.f32 %v708
          %vm716 = vmor %vm714, %vm715
          %v717 = vsel %vm716, %v708, %v713
          %v718 = vperm.slane %v717, 0
          %v719 = vmul.f32 %v705, %v718
          %v720 = vmul.f32 %v706, %v718
          %v721 = vld [vmem:[%s5] sm:$0x1]
          %v723 = vperm.slane %v721, 0
          %v725 = vmul.f32 %v719, %v723
          %v726 = vmul.f32 %v720, %v723
          %v727 = vld [vmem:[%s6] sm:$0x1]
          %v729 = vperm.slane %v727, 0
          %v731 = vadd.f32 %v725, %v729
          %v732 = vadd.f32 %v726, %v729
          %733 = vst [vmem:[#allocation11] sm:$0xff] %v731
          %734 = vst [vmem:[#allocation11 + $0x8] sm:$0xff] %v732
        $region72: #{tpu_custom_call.1} parent=47 // pred_fallthru
          _
        // Predicated region
        $region73: #{tpu_custom_call.1} parent=47 // pred_check
          %p735 = pneg %p206
        $region74: #{tpu_custom_call.1} parent=47 // pred_check_branch
          %737 = sbr.rel (%p735) target = $region76
        $region75: #{tpu_custom_call.1} parent=47 // pred_region
          %739 = vsyncadd [#allocation5], 0
          %s740 = sshll.u32 [#allocation11], 4
          %s741 = int_to_ptr.vmem [resolvable:$true] %s740
          %s742 = sshll.u32 %s7, 4
          %s743 = int_to_ptr.hbm [resolvable:$true] %s742
          %748 = dma.vmem_to_hbm [thread:$0]  %s741, 256, %s743, [#allocation5], 128, 128, 8
        $region76: #{tpu_custom_call.1} parent=47 // pred_fallthru
          _
        // Predicated region
        $region77: #{tpu_custom_call.1} parent=47 // pred_check
          %p749 = pneg %p206
        $region78: #{tpu_custom_call.1} parent=47 // pred_check_branch
          %751 = sbr.rel (%p749) target = $region80
        $region79: #{tpu_custom_call.1} parent=47 // pred_region
          %753 = dma.done [#allocation5], 256
        $region80: #{tpu_custom_call.1} parent=47 // pred_fallthru
          _
      $region48: #{tpu_custom_call.1} parent=5 // pred_fallthru
        _
      %p754 = scmp.le.s32.totalorder 2, %s21
      // Predicated region
      $region81: #{tpu_custom_call.1} parent=5 // pred_check
        %p755 = pneg %p754
      $region82: #{tpu_custom_call.1} parent=5 // pred_check_branch
        %757 = sbr.rel (%p755) target = $region84
      $region83: #{tpu_custom_call.1} parent=5 // pred_region
        %s758 = ssub.s32 %s21, 2
      $region84: #{tpu_custom_call.1} parent=5 // pred_fallthru
        _
    $region6: #{tpu_custom_call.1} parent=1 // loop_footer
      %s25 = sadd.s32 1, %s21
    $region7: #{tpu_custom_call.1} parent=1 // loop_footer_branch
      %20 = sbr.rel target = $region3
    $region8: #{tpu_custom_call.1} parent=1 // loop_exit
      _
    %759 = vsyncpa [#allocation4], 1
    %s760 = scalar_lea.sflag [#allocation4], 1
    %761 = vsyncpa %s760, 1
    %762 = vsyncpa [#allocation7], 1
    %s763 = scalar_lea.sflag [#allocation7], 1
    %764 = vsyncpa %s763, 1
    %765 = vsyncpa [#allocation10], 1
    %s766 = scalar_lea.sflag [#allocation10], 1
    %767 = vsyncpa %s766, 1
    %768 = vsyncpa [#allocation5], 1
    %s769 = scalar_lea.sflag [#allocation5], 1
    %770 = vsyncpa %s769, 1

</llo_original>
